<compile_context>
chip_gen: v5e
topology: v5e:2x2
jax: 0.10.0
libtpu: 0.0.40
codegen_flags: <defaults>
</compile_context>

<pallas_src>
import functools

import jax
import jax.numpy as jnp
from jax import lax
from jax.experimental import pallas as pl
from jax.experimental.pallas import tpu as pltpu


def _silu(v):
    # Exact logistic (the approx-reciprocal version failed the 2e-3 tolerance).
    return v / (1.0 + jnp.exp(-v))


def _round_up(n, m):
    return ((n + m - 1) // m) * m


def _num_tensorcores():
    try:
        dev = jax.devices()[0]
        n = getattr(dev, "num_cores", None)
        return max(1, int(n)) if n else 1
    except Exception:
        return 1


def _pick_bb(B, Cp, HWp):
    """Pick how many batch elements to fold into each grid step's lane axis."""
    ncores = _num_tensorcores()
    budget = 24 * 2 ** 20          # stay well under v7x's 32 MiB scoped default

    def footprint(bb):
        blk = Cp * bb * HWp * 4
        # x/emb/out double-buffered blocks + two (9*Cp, BB*HWp) im2col temps + masks.
        return 3 * 2 * blk + 2 * 9 * blk + 9 * blk

    bb = max(1, min(B, 8))
    while bb > 1 and footprint(bb) > budget:
        bb -= 1
    if ncores > 1:
        # Keep the grid-step count a multiple of the TensorCore count.
        while bb > 1 and pl.cdiv(B, bb) % ncores != 0:
            bb -= 1
    return bb


# --------------------------------------------------------------------------- #
# Embedding MLPs: out = silu([t,c] @ blockdiag(t1,c1) + [t1_b,c1_b]) @ [t2;c2]
#                       + (t2_b + c2_b)
# --------------------------------------------------------------------------- #
def _embedding_kernel(tc_ref, w1_ref, b1_ref, w2_ref, b2_ref, out_ref):
    z = _silu(jnp.dot(tc_ref[...], w1_ref[...],
                      preferred_element_type=jnp.float32) + b1_ref[...])
    out_ref[...] = (jnp.dot(z, w2_ref[...], preferred_element_type=jnp.float32)
                    + b2_ref[...]).astype(out_ref.dtype)


# --------------------------------------------------------------------------- #
# Main residual-block kernel: one grid step = BB batch elements, lane-dense.
# --------------------------------------------------------------------------- #
def _residual_block_kernel(
    x_ref, emb_ref,
    conv1_w_ref, conv1_b_ref, conv2_w_ref, conv2_b_ref,
    gn1_w_ref, gn1_b_ref, gn2_w_ref, gn2_b_ref,
    gmat_ref, mask_ref,
    out_ref,
    *, Cp, HWp, W, BB, eps, pad_lanes,
):
    NL = BB * HWp

    # Hoist every grid-invariant load once.
    gmat = gmat_ref[...]                      # (Cp, Cp), includes the 1/(Cg*HW) factor
    conv1_w = conv1_w_ref[...]                # (Cp, 9*Cp)
    conv1_b = conv1_b_ref[...]                # (Cp, 1)
    conv2_w = conv2_w_ref[...]
    conv2_b = conv2_b_ref[...]
    gn1_w = gn1_w_ref[...]                    # (Cp, 1)
    gn1_b = gn1_b_ref[...]
    gn2_w = gn2_w_ref[...]
    gn2_b = gn2_b_ref[...]
    masks = [mask_ref[k] for k in range(9)]   # 9 x (Cp, NL), pre-broadcast wrapper-side
    vmask = masks[4][:, :HWp] if pad_lanes else None   # center tap == valid-lane mask

    def group_norm(v, gamma, beta):
        # Lane-reduce first, then group-mix the tiny (Cp, 1) sums (MXU work is
        # (Cp,Cp)@(Cp,1), not (Cp,Cp)@(Cp,HW)); gamma folded into the rsqrt scale.
        pieces = []
        for bb in range(BB):                                  # static, lane-aligned slices
            vb = v[:, bb * HWp:(bb + 1) * HWp]                             # (Cp, HWp)
            s = jnp.sum(vb, axis=1, keepdims=True)                         # (Cp, 1)
            mean = jnp.dot(gmat, s, preferred_element_type=jnp.float32)    # (Cp, 1)
            d = vb - mean
            dm = d * vmask if pad_lanes else d
            s2 = jnp.sum(dm * dm, axis=1, keepdims=True)
            var = jnp.dot(gmat, s2, preferred_element_type=jnp.float32)
            scale = lax.rsqrt(var + eps) * gamma                           # (Cp, 1)
            pieces.append(d * scale + beta)
        return jnp.concatenate(pieces, axis=1)                             # (Cp, NL)

    def conv3x3(v, w9, b):
        # im2col over the 9 taps for ALL BB elements at once (rolled + masked
        # copies stacked on sublanes), then ONE MXU matmul: K=9*Cp, N=BB*HWp.
        taps = []
        for k in range(9):
            dy, dx = k // 3, k % 3
            off = (dy - 1) * W + (dx - 1)        # flat shift on each element's HW axis
            shifted = pltpu.roll(v, shift=(-off) % NL, axis=1)
            taps.append(shifted * masks[k])
        patches = jnp.concatenate(taps, axis=0)                            # (9*Cp, NL)
        out = jnp.dot(w9, patches, preferred_element_type=jnp.float32) + b
        if pad_lanes:
            out = out * masks[4]                 # zero the HW -> HWp pad lanes
        return out

    x = x_ref[0]                                 # (Cp, NL)
    h = group_norm(x, gn1_w, gn1_b)
    h = _silu(conv3x3(h, conv1_w, conv1_b))
    h = h + emb_ref[0]                           # precomputed time + class term
    h = group_norm(h, gn2_w, gn2_b)
    h = _silu(conv3x3(h, conv2_w, conv2_b))
    out_ref[0] = (h + x).astype(out_ref.dtype)


def residual_block_forward(x, t, c, params, *, groups):
    B, C, H, W = x.shape
    HW = H * W
    CHW = C * HW
    eps = 1e-5
    f32 = jnp.float32

    # ---------------- embedding MLPs: one fused, CHW-tiled pallas_call ----------------
    t_in, c_in = t.shape[1], c.shape[1]
    t_hid, c_hid = params["t1_b"].shape[0], params["c1_b"].shape[0]
    tc = jnp.concatenate([t, c], axis=1).astype(f32)                    # (B, t_in+c_in)
    w1 = jnp.zeros((t_in + c_in, t_hid + c_hid), f32)
    w1 = w1.at[:t_in, :t_hid].set(params["t1_w"].T)
    w1 = w1.at[t_in:, t_hid:].set(params["c1_w"].T)
    b1 = jnp.concatenate([params["t1_b"], params["c1_b"]]).reshape(1, t_hid + c_hid)
    w2 = jnp.concatenate([params["t2_w"].T, params["c2_w"].T], axis=0)  # (K2, CHW)
    b2 = (params["t2_b"] + params["c2_b"]).reshape(1, CHW)

    TN = min(2048, _round_up(CHW, 128))
    CHWp = _round_up(CHW, TN)
    w2 = jnp.pad(w2, ((0, 0), (0, CHWp - CHW)))
    b2 = jnp.pad(b2, ((0, 0), (0, CHWp - CHW)))

    emb = pl.pallas_call(
        _embedding_kernel,
        out_shape=jax.ShapeDtypeStruct((B, CHWp), f32),
        grid=(CHWp // TN,),
        in_specs=[pl.BlockSpec((B, t_in + c_in), lambda j: (0, 0)),
                  pl.BlockSpec((t_in + c_in, t_hid + c_hid), lambda j: (0, 0)),
                  pl.BlockSpec((1, t_hid + c_hid), lambda j: (0, 0)),
                  pl.BlockSpec((w2.shape[0], TN), lambda j: (0, j)),
                  pl.BlockSpec((1, TN), lambda j: (0, j))],
        out_specs=pl.BlockSpec((B, TN), lambda j: (0, j)),
        compiler_params=pltpu.CompilerParams(dimension_semantics=("parallel",)),
    )(tc, w1, b1, w2, b2)
    emb = emb[:, :CHW]

    # ---------------- main residual-block kernel ----------------
    Cp = _round_up(C, 8)           # f32 sublane tile
    HWp = _round_up(HW, 128)       # lane-dense spatial axis
    Cg = C // groups

    BB = _pick_bb(B, Cp, HWp)
    Bp = pl.cdiv(B, BB) * BB
    steps = Bp // BB
    NL = BB * HWp
    pad_lanes = HWp != HW

    def pack_conv(w):              # torch (O, I, 3, 3) -> (Cp, 9*Cp), tap k = dy*3+dx
        w4 = jnp.transpose(w, (0, 2, 3, 1))                  # (O, ky, kx, I)
        w4 = jnp.pad(w4, ((0, Cp - C), (0, 0), (0, 0), (0, Cp - C)))
        return w4.reshape(Cp, 9 * Cp)

    def pad_vec(v):                # (C,) -> (Cp, 1), pad rows = 0
        return jnp.pad(v, (0, Cp - C)).reshape(Cp, 1)

    conv1_w9, conv2_w9 = pack_conv(params["conv1_w"]), pack_conv(params["conv2_w"])
    conv1_b, conv2_b = pad_vec(params["conv1_b"]), pad_vec(params["conv2_b"])
    gn1_w, gn1_b = pad_vec(params["gn1_w"]), pad_vec(params["gn1_b"])
    gn2_w, gn2_b = pad_vec(params["gn2_w"]), pad_vec(params["gn2_b"])

    # Group-averaging matrix: (gmat @ s) mixes same-group channels with weight
    # 1/(Cg*HW); zero rows/cols keep the padded channels at exactly 0.
    ch = jnp.arange(Cp)
    gid = ch // Cg
    real = ch < C
    gmat = ((gid[:, None] == gid[None, :]) & real[:, None] & real[None, :]
            ).astype(f32) / float(Cg * HW)

    # Tap-validity lane masks for the 3x3 conv's zero padding (plus the HW->HWp
    # pad lanes), tiled over the BB elements folded into the lane axis and
    # pre-broadcast to Cp sublanes (hoisted once; no in-kernel broadcasts).
    pos = jnp.arange(HWp, dtype=jnp.int32)
    xs, ys = pos % W, pos // W
    in_img = pos < HW
    rows = []
    for k in range(9):
        dy, dx = k // 3, k % 3
        rows.append(in_img & (xs + dx - 1 >= 0) & (xs + dx - 1 < W)
                    & (ys + dy - 1 >= 0) & (ys + dy - 1 < H))
    mask_hw = jnp.stack(rows).astype(f32)                                # (9, HWp)
    masks = jnp.broadcast_to(jnp.tile(mask_hw, (1, BB))[:, None, :], (9, Cp, NL))

    def pack_act(a):               # (B, C, HW) -> (steps, Cp, BB*HWp), lane-dense
        a = jnp.pad(a, ((0, Bp - B), (0, Cp - C), (0, HWp - HW)))
        return (a.reshape(steps, BB, Cp, HWp)
                 .transpose(0, 2, 1, 3)
                 .reshape(steps, Cp, NL))

    x2 = pack_act(x.reshape(B, C, HW).astype(f32))
    emb2 = pack_act(emb.reshape(B, C, HW))

    weight_args = [conv1_w9, conv1_b, conv2_w9, conv2_b,
                   gn1_w, gn1_b, gn2_w, gn2_b, gmat, masks]

    # Production-size follow-ups (not needed at toy f32 sizes): bf16 MXU operands
    # and pipeline_mode=pl.Buffered(1) on these grid-invariant operands.
    def const_spec(a):
        nd = a.ndim
        return pl.BlockSpec(a.shape, lambda b, _nd=nd: (0,) * _nd)

    blk_bytes = Cp * NL * 4
    vmem_est = (3 * 2 + 4 * 9) * blk_bytes + (1 << 20)
    vmem_limit = int(min(64 * 2 ** 20, max(16 * 2 ** 20, 2 * vmem_est)))

    kernel = functools.partial(_residual_block_kernel,
                               Cp=Cp, HWp=HWp, W=W, BB=BB, eps=eps,
                               pad_lanes=pad_lanes)

    out = pl.pallas_call(
        kernel,
        out_shape=jax.ShapeDtypeStruct((steps, Cp, NL), x.dtype),
        grid=(steps,),
        in_specs=[pl.BlockSpec((1, Cp, NL), lambda b: (b, 0, 0)),   # x
                  pl.BlockSpec((1, Cp, NL), lambda b: (b, 0, 0))]   # embedding term
                 + [const_spec(w) for w in weight_args],
        out_specs=pl.BlockSpec((1, Cp, NL), lambda b: (b, 0, 0)),
        compiler_params=pltpu.CompilerParams(
            dimension_semantics=("parallel",),
            vmem_limit_bytes=vmem_limit),
    )(x2, emb2, *weight_args)

    out = (out.reshape(steps, Cp, BB, HWp)
              .transpose(0, 2, 1, 3)
              .reshape(Bp, Cp, HWp))
    return out[:B, :C, :HW].reshape(B, C, H, W)


def ref_forward(x, t, c, params, *, groups):
    """Pure-JAX reference matching the PyTorch module."""
    eps = 1e-5

    def silu(v):
        return v * jax.nn.sigmoid(v)

    def gn(v, gamma, beta):
        B, C, H, W = v.shape
        vg = v.reshape(B, groups, -1)
        mean = vg.mean(-1, keepdims=True)
        var = ((vg - mean) ** 2).mean(-1, keepdims=True)
        vn = ((vg - mean) / jnp.sqrt(var + eps)).reshape(B, C, H, W)
        return vn * gamma[None, :, None, None] + beta[None, :, None, None]

    def conv(v, w, b):
        out = lax.conv_general_dilated(
            v, w, window_strides=(1, 1), padding=((1, 1), (1, 1)),
            dimension_numbers=("NCHW", "OIHW", "NCHW"))
        return out + b[None, :, None, None]

    x_init = x
    h = gn(x, params["gn1_w"], params["gn1_b"])
    h = silu(conv(h, params["conv1_w"], params["conv1_b"]))
    tt = silu(t @ params["t1_w"].T + params["t1_b"])
    tt = (tt @ params["t2_w"].T + params["t2_b"]).reshape(h.shape)
    h = h + tt
    cc = silu(c @ params["c1_w"].T + params["c1_b"])
    cc = (cc @ params["c2_w"].T + params["c2_b"]).reshape(h.shape)
    h = h + cc
    h = gn(h, params["gn2_w"], params["gn2_b"])
    h = silu(conv(h, params["conv2_w"], params["conv2_b"]))
    return h + x_init


if __name__ == "__main__":
    B, C, H, W = 2, 4, 16, 16
    GROUPS = 2
    TDIM = 32   # time_embedding_dimension
    EDIM = 32   # class_embedding_dimension (== TDIM so layer_c1(T->T) chains into layer_c2)
    CHW = C * H * W

    key = jax.random.PRNGKey(0)
    ks = jax.random.split(key, 16)

    def rnd(k, shape, scale=0.1):
        return (scale * jax.random.normal(k, shape)).astype(jnp.float32)

    params = {
        "conv1_w": rnd(ks[0], (C, C, 3, 3)),
        "conv1_b": rnd(ks[1], (C,)),
        "conv2_w": rnd(ks[2], (C, C, 3, 3)),
        "conv2_b": rnd(ks[3], (C,)),
        "t1_w": rnd(ks[4], (TDIM, TDIM)),
        "t1_b": rnd(ks[5], (TDIM,)),
        "t2_w": rnd(ks[6], (CHW, TDIM)),
        "t2_b": rnd(ks[7], (CHW,)),
        "c1_w": rnd(ks[8], (TDIM, TDIM)),
        "c1_b": rnd(ks[9], (TDIM,)),
        "c2_w": rnd(ks[10], (CHW, EDIM)),
        "c2_b": rnd(ks[11], (CHW,)),
        "gn1_w": jnp.ones((C,), jnp.float32),
        "gn1_b": jnp.zeros((C,), jnp.float32),
        "gn2_w": jnp.ones((C,), jnp.float32),
        "gn2_b": jnp.zeros((C,), jnp.float32),
    }

    x = rnd(ks[12], (B, C, H, W), scale=1.0)
    t = rnd(ks[13], (B, TDIM), scale=1.0)
    c = rnd(ks[14], (B, EDIM), scale=1.0)

    out = residual_block_forward(x, t, c, params, groups=GROUPS)
    out = jax.block_until_ready(out)

    ref = ref_forward(x, t, c, params, groups=GROUPS)
    assert out.shape == (B, C, H, W)
    assert bool(jnp.allclose(out, ref, atol=2e-3, rtol=2e-3)), (
        "max abs diff: %s" % float(jnp.max(jnp.abs(out - ref))))
    print("KERNEL_OK")
</pallas_src>

<mosaic_0001>
module attributes {stable_mosaic.version = 11 : i64} {
  func.func @_embedding_kernel(%arg0: i32, %arg1: memref<2x64xf32, #tpu.memory_space<vmem>>, %arg2: memref<64x64xf32, #tpu.memory_space<vmem>>, %arg3: memref<1x64xf32, #tpu.memory_space<vmem>>, %arg4: memref<64x1024xf32, #tpu.memory_space<vmem>>, %arg5: memref<1x1024xf32, #tpu.memory_space<vmem>>, %arg6: memref<2x1024xf32, #tpu.memory_space<vmem>>) attributes {dimension_semantics = [#tpu.dimension_semantics<parallel>], iteration_bounds = array<i64: 1>, scalar_prefetch = 0 : i64, scratch_operands = 0 : i64, tpu.core_type = #tpu.core_type<tc>, window_params = [{pipeline_mode = #tpu.pipeline_mode<synchronous>, transform_indices = @transform_0, window_bounds = array<i64: 2, 64>}, {pipeline_mode = #tpu.pipeline_mode<synchronous>, transform_indices = @transform_1, window_bounds = array<i64: 64, 64>}, {pipeline_mode = #tpu.pipeline_mode<synchronous>, transform_indices = @transform_2, window_bounds = array<i64: 1, 64>}, {transform_indices = @transform_3, window_bounds = array<i64: 64, 1024>}, {transform_indices = @transform_4, window_bounds = array<i64: 1, 1024>}, {transform_indices = @transform_5, window_bounds = array<i64: 2, 1024>}]} {
    %c0 = arith.constant 0 : index
    %c0_0 = arith.constant 0 : index
    %0 = vector.load %arg1[%c0, %c0_0] : memref<2x64xf32, #tpu.memory_space<vmem>>, vector<2x64xf32>
    %c0_1 = arith.constant 0 : index
    %c0_2 = arith.constant 0 : index
    %1 = vector.load %arg2[%c0_1, %c0_2] : memref<64x64xf32, #tpu.memory_space<vmem>>, vector<64x64xf32>
    %cst = arith.constant dense<0.000000e+00> : vector<2x64xf32>
    %2 = tpu.matmul %0, %1, %cst {dimension_numbers = #tpu.dot_dimension_numbers<[1], [0], [0], [1], [0, 0, 1, 1], [], []>} : vector<2x64xf32>, vector<64x64xf32>, vector<2x64xf32> -> vector<2x64xf32>
    %c0_3 = arith.constant 0 : index
    %c0_4 = arith.constant 0 : index
    %3 = vector.load %arg3[%c0_3, %c0_4] : memref<1x64xf32, #tpu.memory_space<vmem>>, vector<1x64xf32>
    %4 = vector.broadcast %3 : vector<1x64xf32> to vector<2x64xf32>
    %5 = arith.addf %2, %4 : vector<2x64xf32>
    %cst_5 = arith.constant 0.000000e+00 : f32
    %6 = vector.broadcast %cst_5 : f32 to vector<2x64xf32>
    %7 = arith.subf %6, %5 : vector<2x64xf32>
    %8 = math.exp %7 : vector<2x64xf32>
    %cst_6 = arith.constant 1.000000e+00 : f32
    %9 = vector.broadcast %cst_6 : f32 to vector<2x64xf32>
    %10 = arith.addf %9, %8 : vector<2x64xf32>
    %11 = arith.divf %5, %10 : vector<2x64xf32>
    %c0_7 = arith.constant 0 : index
    %c0_8 = arith.constant 0 : index
    %12 = vector.load %arg4[%c0_7, %c0_8] : memref<64x1024xf32, #tpu.memory_space<vmem>>, vector<64x1024xf32>
    %cst_9 = arith.constant dense<0.000000e+00> : vector<2x1024xf32>
    %13 = tpu.matmul %11, %12, %cst_9 {dimension_numbers = #tpu.dot_dimension_numbers<[1], [0], [0], [1], [0, 0, 1, 1], [], []>} : vector<2x64xf32>, vector<64x1024xf32>, vector<2x1024xf32> -> vector<2x1024xf32>
    %c0_10 = arith.constant 0 : index
    %c0_11 = arith.constant 0 : index
    %14 = vector.load %arg5[%c0_10, %c0_11] : memref<1x1024xf32, #tpu.memory_space<vmem>>, vector<1x1024xf32>
    %15 = vector.broadcast %14 : vector<1x1024xf32> to vector<2x1024xf32>
    %16 = arith.addf %13, %15 : vector<2x1024xf32>
    %c0_12 = arith.constant 0 : index
    %c0_13 = arith.constant 0 : index
    %17 = vector.load %arg6[%c0_12, %c0_13] : memref<2x1024xf32, #tpu.memory_space<vmem>>, vector<2x1024xf32>
    tpu.vector_store %arg6[%c0_12, %c0_13], %16 {strides = array<i32>} : memref<2x1024xf32, #tpu.memory_space<vmem>>, vector<2x1024xf32>,
    return
  }
  func.func @transform_0(%arg0: i32) -> (i32, i32) {
    %c0_i32 = arith.constant 0 : i32
    %c0_i32_0 = arith.constant 0 : i32
    %c0_i32_1 = arith.constant 0 : i32
    return %c0_i32, %c0_i32_0 : i32, i32
  }
  func.func @transform_1(%arg0: i32) -> (i32, i32) {
    %c0_i32 = arith.constant 0 : i32
    %c0_i32_0 = arith.constant 0 : i32
    %c0_i32_1 = arith.constant 0 : i32
    return %c0_i32, %c0_i32_0 : i32, i32
  }
  func.func @transform_2(%arg0: i32) -> (i32, i32) {
    %c0_i32 = arith.constant 0 : i32
    %c0_i32_0 = arith.constant 0 : i32
    %c0_i32_1 = arith.constant 0 : i32
    return %c0_i32, %c0_i32_0 : i32, i32
  }
  func.func @transform_3(%arg0: i32) -> (i32, i32) {
    %c0_i32 = arith.constant 0 : i32
    %c0_i32_0 = arith.constant 0 : i32
    return %c0_i32, %arg0 : i32, i32
  }
  func.func @transform_4(%arg0: i32) -> (i32, i32) {
    %c0_i32 = arith.constant 0 : i32
    %c0_i32_0 = arith.constant 0 : i32
    return %c0_i32, %arg0 : i32, i32
  }
  func.func @transform_5(%arg0: i32) -> (i32, i32) {
    %c0_i32 = arith.constant 0 : i32
    %c0_i32_0 = arith.constant 0 : i32
    return %c0_i32, %arg0 : i32, i32
  }
}

</mosaic_0001>

<llo_original>
// kernel: tpu_custom_call.1
$region0: #{tpu_custom_call.1}
  #allocation0 [shape = 'u32[]', space=smem, size = 0x4, offset = 0x4, fixed_abs, tag = 'smem constant byte address 0x4 - core index']
  #allocation1 [shape = 'u32[72,128]{1,0:T(1,128)}', space=vmem, size = 0x9000, scoped, tag = 'internal scratch']
  %s0 = inlined_call_operand.hbm [shape: f32[2,64], index: 0, kind: input, shape index: {}]
  %s1 = inlined_call_operand.hbm [shape: f32[64,64], index: 1, kind: input, shape index: {}]
  %s2 = inlined_call_operand.vmem [shape: f32[1,64], index: 2, kind: input, shape index: {}]
  %s3 = inlined_call_operand.hbm [shape: f32[64,1024], index: 3, kind: input, shape index: {}]
  %s4 = inlined_call_operand.hbm [shape: f32[1,1024], index: 4, kind: input, shape index: {}]
  %s5 = inlined_call_operand.hbm [shape: f32[2,1024], index: 5, kind: output, shape index: {}]
  %s6 = sld [smem:[#allocation0]]
  $region46: #{tpu_custom_call.1} parent=0
    _
  %s8 = ssub.s32 1, %s6
  %s9 = scalar_select 0, %s8, %s6
  $region1: #{tpu_custom_call.1} parent=0
    #allocation2 [shape = 'u8[1024]{0}', space=vmem, size = 0x400, scoped, tag = 'input window, operand 0, single buffered']
    #allocation3 [shape = 's32[1]{0}', space=sflag, size = 0x4, scoped, tag = 'scoped memory for tpu_custom_call.1']
    #allocation4 [shape = 's32[1]{0}', space=sflag, size = 0x4, scoped, tag = 'scoped memory for tpu_custom_call.1']
    #allocation5 [shape = 'u8[32768]{0}', space=vmem, size = 0x8000, scoped, tag = 'input window, operand 1, single buffered']
    #allocation6 [shape = 's32[1]{0}', space=sflag, size = 0x4, scoped, tag = 'scoped memory for tpu_custom_call.1']
    #allocation7 [shape = 'u8[262144]{0}', space=vmem, size = 0x40000, scoped, tag = 'input window, operand 3, single buffered']
    #allocation8 [shape = 'u8[4096]{0}', space=vmem, size = 0x1000, scoped, tag = 'input window, operand 4, single buffered']
    #allocation9 [shape = 's32[1]{0}', space=sflag, size = 0x4, scoped, tag = 'scoped memory for tpu_custom_call.1']
    #allocation10 [shape = 'u8[8192]{0}', space=vmem, size = 0x2000, scoped, tag = 'output window, operand 0, single buffered']
    %10 = vsyncpa [#allocation3], 0
    %11 = vsyncpa [#allocation6], 0
    %12 = vsyncpa [#allocation9], 0
    %13 = vsyncpa [#allocation4], 0
    // Predicated region
    $region2: #{tpu_custom_call.1} parent=1 // pred_check
      _
    $region3: #{tpu_custom_call.1} parent=1 // pred_check_branch
      %15 = sbr.rel (0) target = $region5
    $region4: #{tpu_custom_call.1} parent=1 // pred_region
      %17 = vsyncadd [#allocation3], 0
      %s19 = sshll.u32 %s0, 4
      %s20 = int_to_ptr.hbm [resolvable:$true] %s19
      %s21 = sshll.u32 [#allocation2], 4
      %s22 = int_to_ptr.vmem [resolvable:$true] %s21
      %24 = dma.hbm_to_vmem [thread:$0]  %s20, 32, %s22, [#allocation3]
    $region5: #{tpu_custom_call.1} parent=1 // pred_fallthru
      _
    // Predicated region
    $region6: #{tpu_custom_call.1} parent=1 // pred_check
      _
    $region7: #{tpu_custom_call.1} parent=1 // pred_check_branch
      %26 = sbr.rel (0) target = $region9
    $region8: #{tpu_custom_call.1} parent=1 // pred_region
      %28 = vsyncadd [#allocation6], 0
      %s29 = sshll.u32 %s1, 4
      %s30 = int_to_ptr.hbm [resolvable:$true] %s29
      %s31 = sshll.u32 [#allocation5], 4
      %s32 = int_to_ptr.vmem [resolvable:$true] %s31
      %37 = dma.hbm_to_vmem [thread:$0]  %s30, 1024, %s32, [#allocation6], 128, 128, 8
    $region9: #{tpu_custom_call.1} parent=1 // pred_fallthru
      _
    // Predicated region
    $region10: #{tpu_custom_call.1} parent=1 // pred_check
      _
    $region11: #{tpu_custom_call.1} parent=1 // pred_check_branch
      %39 = sbr.rel (0) target = $region13
    $region12: #{tpu_custom_call.1} parent=1 // pred_region
      _
    $region13: #{tpu_custom_call.1} parent=1 // pred_fallthru
      _
    // Predicated region
    $region14: #{tpu_custom_call.1} parent=1 // pred_check
      _
    $region15: #{tpu_custom_call.1} parent=1 // pred_check_branch
      %41 = sbr.rel (0) target = $region17
    $region16: #{tpu_custom_call.1} parent=1 // pred_region
      %43 = vsyncadd [#allocation6], 0
      %s44 = sshll.u32 %s3, 4
      %s45 = int_to_ptr.hbm [resolvable:$true] %s44
      %s46 = sshll.u32 [#allocation7], 4
      %s47 = int_to_ptr.vmem [resolvable:$true] %s46
      %52 = dma.hbm_to_vmem [thread:$0]  %s45, 8192, %s47, [#allocation6], 1024, 1024, 64
    $region17: #{tpu_custom_call.1} parent=1 // pred_fallthru
      _
    // Predicated region
    $region18: #{tpu_custom_call.1} parent=1 // pred_check
      _
    $region19: #{tpu_custom_call.1} parent=1 // pred_check_branch
      %54 = sbr.rel (0) target = $region21
    $region20: #{tpu_custom_call.1} parent=1 // pred_region
      %56 = vsyncadd [#allocation9], 0
      %s58 = sshll.u32 %s4, 4
      %s59 = int_to_ptr.hbm [resolvable:$true] %s58
      %s60 = sshll.u32 [#allocation8], 4
      %s61 = int_to_ptr.vmem [resolvable:$true] %s60
      %63 = dma.hbm_to_vmem [thread:$0]  %s59, 128, %s61, [#allocation9]
    $region21: #{tpu_custom_call.1} parent=1 // pred_fallthru
      _
    // Predicated region
    $region22: #{tpu_custom_call.1} parent=1 // pred_check
      _
    $region23: #{tpu_custom_call.1} parent=1 // pred_check_branch
      %65 = sbr.rel (0) target = $region25
    $region24: #{tpu_custom_call.1} parent=1 // pred_region
      %67 = dma.done [#allocation3], 32
    $region25: #{tpu_custom_call.1} parent=1 // pred_fallthru
      _
    // Predicated region
    $region26: #{tpu_custom_call.1} parent=1 // pred_check
      _
    $region27: #{tpu_custom_call.1} parent=1 // pred_check_branch
      %69 = sbr.rel (0) target = $region29
    $region28: #{tpu_custom_call.1} parent=1 // pred_region
      %71 = dma.done [#allocation6], 1024
    $region29: #{tpu_custom_call.1} parent=1 // pred_fallthru
      _
    // Predicated region
    $region30: #{tpu_custom_call.1} parent=1 // pred_check
      _
    $region31: #{tpu_custom_call.1} parent=1 // pred_check_branch
      %73 = sbr.rel (0) target = $region33
    $region32: #{tpu_custom_call.1} parent=1 // pred_region
      %75 = dma.done [#allocation6], 8192
    $region33: #{tpu_custom_call.1} parent=1 // pred_fallthru
      _
    // Predicated region
    $region34: #{tpu_custom_call.1} parent=1 // pred_check
      _
    $region35: #{tpu_custom_call.1} parent=1 // pred_check_branch
      %77 = sbr.rel (0) target = $region37
    $region36: #{tpu_custom_call.1} parent=1 // pred_region
      %79 = dma.done [#allocation9], 128
    $region37: #{tpu_custom_call.1} parent=1 // pred_fallthru
      _
    %v80 = vld [vmem:[#allocation2] sm:$0x3]
    %v81 = vld [vmem:[#allocation5] sm:$0xff]
    %v82 = vld [vmem:[#allocation5 + $0x8] sm:$0xff]
    %v83 = vld [vmem:[#allocation5 + $0x10] sm:$0xff]
    %v84 = vld [vmem:[#allocation5 + $0x18] sm:$0xff]
    %v85 = vld [vmem:[#allocation5 + $0x20] sm:$0xff]
    %v86 = vld [vmem:[#allocation5 + $0x28] sm:$0xff]
    %v87 = vld [vmem:[#allocation5 + $0x30] sm:$0xff]
    %v88 = vld [vmem:[#allocation5 + $0x38] sm:$0xff]
    %v89 = vld [vmem:[%s2] sm:$0x1]
    %v91 = vperm.slane %v89, 0
    %vm93 = vcmask 523264
    %v95 = vsel %vm93, %v80, 0
    %97 = vmatpush.msra.mxu0 0.0
    %98 = vmatpush.msra.mxu0 0.0
    %99 = vmatpush.msra.mxu0 0.0
    %100 = vmatpush.msra.mxu0 0.0
    %101 = vmatpush.msra.mxu0 0.0
    %102 = vmatpush.msra.mxu0 0.0
    %103 = vmatpush.msra.mxu0 0.0
    %104 = vmatpush.msra.mxu0 0.0
    %105 = vmatpush.msra.mxu0 %v88
    %106 = vmatpush.msra.mxu0 %v87
    %107 = vmatpush.msra.mxu0 %v86
    %108 = vmatpush.msra.mxu0 %v85
    %109 = vmatpush.msra.mxu0 %v84
    %110 = vmatpush.msra.mxu0 %v83
    %111 = vmatpush.msra.mxu0 %v82
    %112 = vmatpush.msra.mxu0 %v81
    %113 = vmatmul.f32.gmra.mxu0 %v95
    %v114 = vpop.f32.mrf.mxu0
    %v115 = vadd.f32 %v91, %v114
    %116 = vdwg.mxu0
    %v117 = vsub.f32 0.0, %v115
    %v118 = vmul.f32 %v117, 1.442695
    %v119 = vpow.pop %v118
    %v120 = vadd.f32 %v119, 1.0
    %v121 = vrcp.pop %v120
    %v122 = vmul.f32 %v120, %v121
    %v123 = vsub.f32 1.0, %v122
    %v124 = vmul.f32 %v121, %v123
    %v125 = vadd.f32 %v121, %v124
    %vm126 = vweird.f32 %v120
    %vm127 = vweird.f32 %v121
    %vm128 = vmor %vm126, %vm127
    %v129 = vsel %vm128, %v121, %v125
    %v130 = vand.u32 2147483647, %v120
    %vm131 = vcmp.eq.f32.partialorder %v130, 8.507059e+37
    %v132 = vand.u32 %v120, 2147483648
    %v133 = vor.u32 1.1754944e-38, %v132
    %v134 = vsel %vm131, %v133, %v129
    %v135 = vmul.f32 %v115, %v134
    %v136 = vld [vmem:[#allocation7] sm:$0xff]
    %v137 = vld [vmem:[#allocation7 + $0x8] sm:$0xff]
    %v138 = vld [vmem:[#allocation7 + $0x10] sm:$0xff]
    %v139 = vld [vmem:[#allocation7 + $0x18] sm:$0xff]
    %v140 = vld [vmem:[#allocation7 + $0x20] sm:$0xff]
    %v141 = vld [vmem:[#allocation7 + $0x28] sm:$0xff]
    %v142 = vld [vmem:[#allocation7 + $0x30] sm:$0xff]
    %v143 = vld [vmem:[#allocation7 + $0x38] sm:$0xff]
    %v144 = vld [vmem:[#allocation7 + $0x40] sm:$0xff]
    %v145 = vld [vmem:[#allocation7 + $0x48] sm:$0xff]
    %v146 = vld [vmem:[#allocation7 + $0x50] sm:$0xff]
    %v147 = vld [vmem:[#allocation7 + $0x58] sm:$0xff]
    %v148 = vld [vmem:[#allocation7 + $0x60] sm:$0xff]
    %v149 = vld [vmem:[#allocation7 + $0x68] sm:$0xff]
    %v150 = vld [vmem:[#allocation7 + $0x70] sm:$0xff]
    %v151 = vld [vmem:[#allocation7 + $0x78] sm:$0xff]
    %v152 = vld [vmem:[#allocation7 + $0x80] sm:$0xff]
    %v153 = vld [vmem:[#allocation7 + $0x88] sm:$0xff]
    %v154 = vld [vmem:[#allocation7 + $0x90] sm:$0xff]
    %v155 = vld [vmem:[#allocation7 + $0x98] sm:$0xff]
    %v156 = vld [vmem:[#allocation7 + $0xa0] sm:$0xff]
    %v157 = vld [vmem:[#allocation7 + $0xa8] sm:$0xff]
    %v158 = vld [vmem:[#allocation7 + $0xb0] sm:$0xff]
    %v159 = vld [vmem:[#allocation7 + $0xb8] sm:$0xff]
    %v160 = vld [vmem:[#allocation7 + $0xc0] sm:$0xff]
    %v161 = vld [vmem:[#allocation7 + $0xc8] sm:$0xff]
    %v162 = vld [vmem:[#allocation7 + $0xd0] sm:$0xff]
    %v163 = vld [vmem:[#allocation7 + $0xd8] sm:$0xff]
    %v164 = vld [vmem:[#allocation7 + $0xe0] sm:$0xff]
    %v165 = vld [vmem:[#allocation7 + $0xe8] sm:$0xff]
    %v166 = vld [vmem:[#allocation7 + $0xf0] sm:$0xff]
    %v167 = vld [vmem:[#allocation7 + $0xf8] sm:$0xff]
    %v168 = vld [vmem:[#allocation7 + $0x100] sm:$0xff]
    %v169 = vld [vmem:[#allocation7 + $0x108] sm:$0xff]
    %v170 = vld [vmem:[#allocation7 + $0x110] sm:$0xff]
    %v171 = vld [vmem:[#allocation7 + $0x118] sm:$0xff]
    %v172 = vld [vmem:[#allocation7 + $0x120] sm:$0xff]
    %v173 = vld [vmem:[#allocation7 + $0x128] sm:$0xff]
    %v174 = vld [vmem:[#allocation7 + $0x130] sm:$0xff]
    %v175 = vld [vmem:[#allocation7 + $0x138] sm:$0xff]
    %v176 = vld [vmem:[#allocation7 + $0x140] sm:$0xff]
    %v177 = vld [vmem:[#allocation7 + $0x148] sm:$0xff]
    %v178 = vld [vmem:[#allocation7 + $0x150] sm:$0xff]
    %v179 = vld [vmem:[#allocation7 + $0x158] sm:$0xff]
    %v180 = vld [vmem:[#allocation7 + $0x160] sm:$0xff]
    %v181 = vld [vmem:[#allocation7 + $0x168] sm:$0xff]
    %v182 = vld [vmem:[#allocation7 + $0x170] sm:$0xff]
    %v183 = vld [vmem:[#allocation7 + $0x178] sm:$0xff]
    %v184 = vld [vmem:[#allocation7 + $0x180] sm:$0xff]
    %v185 = vld [vmem:[#allocation7 + $0x188] sm:$0xff]
    %v186 = vld [vmem:[#allocation7 + $0x190] sm:$0xff]
    %v187 = vld [vmem:[#allocation7 + $0x198] sm:$0xff]
    %v188 = vld [vmem:[#allocation7 + $0x1a0] sm:$0xff]
    %v189 = vld [vmem:[#allocation7 + $0x1a8] sm:$0xff]
    %v190 = vld [vmem:[#allocation7 + $0x1b0] sm:$0xff]
    %v191 = vld [vmem:[#allocation7 + $0x1b8] sm:$0xff]
    %v192 = vld [vmem:[#allocation7 + $0x1c0] sm:$0xff]
    %v193 = vld [vmem:[#allocation7 + $0x1c8] sm:$0xff]
    %v194 = vld [vmem:[#allocation7 + $0x1d0] sm:$0xff]
    %v195 = vld [vmem:[#allocation7 + $0x1d8] sm:$0xff]
    %v196 = vld [vmem:[#allocation7 + $0x1e0] sm:$0xff]
    %v197 = vld [vmem:[#allocation7 + $0x1e8] sm:$0xff]
    %v198 = vld [vmem:[#allocation7 + $0x1f0] sm:$0xff]
    %v199 = vld [vmem:[#allocation7 + $0x1f8] sm:$0xff]
    %v200 = vld [vmem:[#allocation8] sm:$0xff]
    %v202 = vperm.slane %v200, 0
    %v203 = vperm.slane %v200, 1
    %v204 = vperm.slane %v200, 2
    %v205 = vperm.slane %v200, 3
    %v206 = vperm.slane %v200, 4
    %v207 = vperm.slane %v200, 5
    %v208 = vperm.slane %v200, 6
    %v209 = vperm.slane %v200, 7
    %v219 = vsel %vm93, %v135, 0
    %221 = vmatpush.msra.mxu0 0.0
    %222 = vmatpush.msra.mxu0 0.0
    %223 = vmatpush.msra.mxu0 0.0
    %224 = vmatpush.msra.mxu0 0.0
    %225 = vmatpush.msra.mxu0 0.0
    %226 = vmatpush.msra.mxu0 0.0
    %227 = vmatpush.msra.mxu0 0.0
    %228 = vmatpush.msra.mxu0 0.0
    %229 = vmatpush.msra.mxu0 %v192
    %230 = vmatpush.msra.mxu0 %v184
    %231 = vmatpush.msra.mxu0 %v176
    %232 = vmatpush.msra.mxu0 %v168
    %233 = vmatpush.msra.mxu0 %v160
    %234 = vmatpush.msra.mxu0 %v152
    %235 = vmatpush.msra.mxu0 %v144
    %236 = vmatpush.msra.mxu0 %v136
    %237 = vmatmul.f32.gmra.mxu0 %v219
    %v238 = vpop.f32.mrf.mxu0
    %v239 = vadd.f32 %v202, %v238
    %240 = vdwg.mxu0
    %241 = vmatpush.msra.mxu0 0.0
    %242 = vmatpush.msra.mxu0 0.0
    %243 = vmatpush.msra.mxu0 0.0
    %244 = vmatpush.msra.mxu0 0.0
    %245 = vmatpush.msra.mxu0 0.0
    %246 = vmatpush.msra.mxu0 0.0
    %247 = vmatpush.msra.mxu0 0.0
    %248 = vmatpush.msra.mxu0 0.0
    %249 = vmatpush.msra.mxu0 %v193
    %250 = vmatpush.msra.mxu0 %v185
    %251 = vmatpush.msra.mxu0 %v177
    %252 = vmatpush.msra.mxu0 %v169
    %253 = vmatpush.msra.mxu0 %v161
    %254 = vmatpush.msra.mxu0 %v153
    %255 = vmatpush.msra.mxu0 %v145
    %256 = vmatpush.msra.mxu0 %v137
    %257 = vmatmul.f32.gmra.mxu0 %v219
    %v258 = vpop.f32.mrf.mxu0
    %v259 = vadd.f32 %v203, %v258
    %260 = vdwg.mxu0
    %261 = vmatpush.msra.mxu0 0.0
    %262 = vmatpush.msra.mxu0 0.0
    %263 = vmatpush.msra.mxu0 0.0
    %264 = vmatpush.msra.mxu0 0.0
    %265 = vmatpush.msra.mxu0 0.0
    %266 = vmatpush.msra.mxu0 0.0
    %267 = vmatpush.msra.mxu0 0.0
    %268 = vmatpush.msra.mxu0 0.0
    %269 = vmatpush.msra.mxu0 %v194
    %270 = vmatpush.msra.mxu0 %v186
    %271 = vmatpush.msra.mxu0 %v178
    %272 = vmatpush.msra.mxu0 %v170
    %273 = vmatpush.msra.mxu0 %v162
    %274 = vmatpush.msra.mxu0 %v154
    %275 = vmatpush.msra.mxu0 %v146
    %276 = vmatpush.msra.mxu0 %v138
    %277 = vmatmul.f32.gmra.mxu0 %v219
    %v278 = vpop.f32.mrf.mxu0
    %v279 = vadd.f32 %v204, %v278
    %280 = vdwg.mxu0
    %281 = vmatpush.msra.mxu0 0.0
    %282 = vmatpush.msra.mxu0 0.0
    %283 = vmatpush.msra.mxu0 0.0
    %284 = vmatpush.msra.mxu0 0.0
    %285 = vmatpush.msra.mxu0 0.0
    %286 = vmatpush.msra.mxu0 0.0
    %287 = vmatpush.msra.mxu0 0.0
    %288 = vmatpush.msra.mxu0 0.0
    %289 = vmatpush.msra.mxu0 %v195
    %290 = vmatpush.msra.mxu0 %v187
    %291 = vmatpush.msra.mxu0 %v179
    %292 = vmatpush.msra.mxu0 %v171
    %293 = vmatpush.msra.mxu0 %v163
    %294 = vmatpush.msra.mxu0 %v155
    %295 = vmatpush.msra.mxu0 %v147
    %296 = vmatpush.msra.mxu0 %v139
    %297 = vmatmul.f32.gmra.mxu0 %v219
    %v298 = vpop.f32.mrf.mxu0
    %v299 = vadd.f32 %v205, %v298
    %300 = vdwg.mxu0
    %301 = vmatpush.msra.mxu0 0.0
    %302 = vmatpush.msra.mxu0 0.0
    %303 = vmatpush.msra.mxu0 0.0
    %304 = vmatpush.msra.mxu0 0.0
    %305 = vmatpush.msra.mxu0 0.0
    %306 = vmatpush.msra.mxu0 0.0
    %307 = vmatpush.msra.mxu0 0.0
    %308 = vmatpush.msra.mxu0 0.0
    %309 = vmatpush.msra.mxu0 %v196
    %310 = vmatpush.msra.mxu0 %v188
    %311 = vmatpush.msra.mxu0 %v180
    %312 = vmatpush.msra.mxu0 %v172
    %313 = vmatpush.msra.mxu0 %v164
    %314 = vmatpush.msra.mxu0 %v156
    %315 = vmatpush.msra.mxu0 %v148
    %316 = vmatpush.msra.mxu0 %v140
    %317 = vmatmul.f32.gmra.mxu0 %v219
    %v318 = vpop.f32.mrf.mxu0
    %v319 = vadd.f32 %v206, %v318
    %320 = vdwg.mxu0
    %321 = vmatpush.msra.mxu0 0.0
    %322 = vmatpush.msra.mxu0 0.0
    %323 = vmatpush.msra.mxu0 0.0
    %324 = vmatpush.msra.mxu0 0.0
    %325 = vmatpush.msra.mxu0 0.0
    %326 = vmatpush.msra.mxu0 0.0
    %327 = vmatpush.msra.mxu0 0.0
    %328 = vmatpush.msra.mxu0 0.0
    %329 = vmatpush.msra.mxu0 %v197
    %330 = vmatpush.msra.mxu0 %v189
    %331 = vmatpush.msra.mxu0 %v181
    %332 = vmatpush.msra.mxu0 %v173
    %333 = vmatpush.msra.mxu0 %v165
    %334 = vmatpush.msra.mxu0 %v157
    %335 = vmatpush.msra.mxu0 %v149
    %336 = vmatpush.msra.mxu0 %v141
    %337 = vmatmul.f32.gmra.mxu0 %v219
    %v338 = vpop.f32.mrf.mxu0
    %v339 = vadd.f32 %v207, %v338
    %340 = vdwg.mxu0
    %341 = vmatpush.msra.mxu0 0.0
    %342 = vmatpush.msra.mxu0 0.0
    %343 = vmatpush.msra.mxu0 0.0
    %344 = vmatpush.msra.mxu0 0.0
    %345 = vmatpush.msra.mxu0 0.0
    %346 = vmatpush.msra.mxu0 0.0
    %347 = vmatpush.msra.mxu0 0.0
    %348 = vmatpush.msra.mxu0 0.0
    %349 = vmatpush.msra.mxu0 %v198
    %350 = vmatpush.msra.mxu0 %v190
    %351 = vmatpush.msra.mxu0 %v182
    %352 = vmatpush.msra.mxu0 %v174
    %353 = vmatpush.msra.mxu0 %v166
    %354 = vmatpush.msra.mxu0 %v158
    %355 = vmatpush.msra.mxu0 %v150
    %356 = vmatpush.msra.mxu0 %v142
    %357 = vmatmul.f32.gmra.mxu0 %v219
    %v358 = vpop.f32.mrf.mxu0
    %v359 = vadd.f32 %v208, %v358
    %360 = vdwg.mxu0
    %361 = vmatpush.msra.mxu0 0.0
    %362 = vmatpush.msra.mxu0 0.0
    %363 = vmatpush.msra.mxu0 0.0
    %364 = vmatpush.msra.mxu0 0.0
    %365 = vmatpush.msra.mxu0 0.0
    %366 = vmatpush.msra.mxu0 0.0
    %367 = vmatpush.msra.mxu0 0.0
    %368 = vmatpush.msra.mxu0 0.0
    %369 = vmatpush.msra.mxu0 %v199
    %370 = vmatpush.msra.mxu0 %v191
    %371 = vmatpush.msra.mxu0 %v183
    %372 = vmatpush.msra.mxu0 %v175
    %373 = vmatpush.msra.mxu0 %v167
    %374 = vmatpush.msra.mxu0 %v159
    %375 = vmatpush.msra.mxu0 %v151
    %376 = vmatpush.msra.mxu0 %v143
    %377 = vmatmul.f32.gmra.mxu0 %v219
    %v378 = vpop.f32.mrf.mxu0
    %v379 = vadd.f32 %v209, %v378
    %380 = vdwg.mxu0
    %v389 = vrot.slane %v259, 6
    %v390 = vrot.slane %v279, 4
    %v391 = vrot.slane %v299, 2
    %v392 = vrot.slane %v339, 6
    %v393 = vrot.slane %v359, 4
    %v394 = vrot.slane %v379, 2
    %vm395 = vcmask 1041408
    %v396 = vsel %vm395, %v239, %v389
    %vm397 = vcmask 1045508
    %v398 = vsel %vm397, %v390, %v391
    %vm399 = vcmask 1043456
    %v400 = vsel %vm399, %v396, %v398
    %v401 = vsel %vm395, %v319, %v392
    %v402 = vsel %vm397, %v393, %v394
    %v403 = vsel %vm399, %v401, %v402
    %406 = vst [vmem:[#allocation10] sm:$0xff] %v400
    %407 = vst [vmem:[#allocation10 + $0x8] sm:$0xff] %v403
    // Predicated region
    $region38: #{tpu_custom_call.1} parent=1 // pred_check
      _
    $region39: #{tpu_custom_call.1} parent=1 // pred_check_branch
      %409 = sbr.rel (0) target = $region41
    $region40: #{tpu_custom_call.1} parent=1 // pred_region
      %411 = vsyncadd [#allocation4], 0
      %s413 = sshll.u32 [#allocation10], 4
      %s414 = int_to_ptr.vmem [resolvable:$true] %s413
      %s415 = sshll.u32 %s5, 4
      %s416 = int_to_ptr.hbm [resolvable:$true] %s415
      %418 = dma.vmem_to_hbm [thread:$0]  %s414, 256, %s416, [#allocation4]
    $region41: #{tpu_custom_call.1} parent=1 // pred_fallthru
      _
    // Predicated region
    $region42: #{tpu_custom_call.1} parent=1 // pred_check
      _
    $region43: #{tpu_custom_call.1} parent=1 // pred_check_branch
      %420 = sbr.rel (0) target = $region45
    $region44: #{tpu_custom_call.1} parent=1 // pred_region
      %422 = dma.done [#allocation4], 256
    $region45: #{tpu_custom_call.1} parent=1 // pred_fallthru
      _
    %423 = vsyncpa [#allocation3], 1
    %424 = vsyncpa [#allocation6], 1
    %425 = vsyncpa [#allocation9], 1
    %426 = vsyncpa [#allocation4], 1

</llo_original>
